<compile_context>
chip_gen: v7x
topology: tpu7x:2x2x1
jax: 0.10.0
libtpu: 0.0.40
codegen_flags: <defaults>
</compile_context>

<pallas_src>
import functools

import jax
import jax.numpy as jnp
from jax.experimental import pallas as pl
from jax.experimental.pallas import tpu as pltpu

BN_EPS = 1e-5
LANE = 128          # TPU lane width (last-dim tile)
SUBLANE = 8         # sublane width (second-to-last-dim tile)
F_IN = 256          # input features
H1, H1P = 400, 512  # first hidden width and its lane-padded width
H2, H3 = 128, 32    # remaining hidden widths
NEG_BIG = -1e30     # bias for padded logit columns (exp -> 0 in the softmax)


def _round_up(n, m):
    return ((n + m - 1) // m) * m


def _tpu_defaults():
    """(tile_b, fused_max, vmem_limit_bytes) tuned per TPU generation."""
    try:
        vmem_cap = getattr(pltpu.get_tpu_info(), "vmem_capacity_bytes", 64 << 20)
    except Exception:            # query unavailable -> conservative (v7x-safe)
        vmem_cap = 64 << 20
    if vmem_cap > (96 << 20):    # v5e / v6e: 128 MiB VMEM, single TensorCore
        return 2048, 4096, 64 << 20
    return 1024, 1024, 40 << 20  # v7x: 64 MiB VMEM per TC, 2 TCs


# ---------------------------------------------------------------------------
# Shared MLP tail: folded BN -> ReLU -> L2 -> ReLU -> L3 -> ReLU -> L4 -> softmax
# (BN / last layer / softmax math in f32; L2/L3 dots in the weights' dtype
#  with f32 accumulation)
# ---------------------------------------------------------------------------
def _mlp_tail(h, scale, shift, w2, b2, w3, b3, w4, b4):
    a1 = jnp.maximum(h * scale + shift, 0.0)
    a2 = jnp.maximum(
        jnp.dot(a1.astype(w2.dtype), w2, preferred_element_type=jnp.float32) + b2, 0.0)
    a3 = jnp.maximum(
        jnp.dot(a2.astype(w3.dtype), w3, preferred_element_type=jnp.float32) + b3, 0.0)
    logits = jnp.dot(a3, w4, preferred_element_type=jnp.float32) + b4
    m = jnp.max(logits, axis=-1, keepdims=True)
    e = jnp.exp(logits - m)
    inv = pl.reciprocal(jnp.sum(e, axis=-1, keepdims=True), approx=False)
    return e * inv


# ---------------------------------------------------------------------------
# Pass 1 (tiled path): h = x @ w1 + b1, spilled to HBM, plus partial BN stats.
# Grid is (core_split, tiles_per_split); stats accumulate along the
# "arbitrary" axis into a per-core (8, H1P) partial-sum block.
# ---------------------------------------------------------------------------
def _stats_kernel(x_ref, w1_ref, b1_ref, h_ref, s1_ref, s2_ref):
    @pl.when(pl.program_id(1) == 0)
    def _():
        s1_ref[...] = jnp.zeros_like(s1_ref)
        s2_ref[...] = jnp.zeros_like(s2_ref)

    h = jnp.dot(x_ref[...], w1_ref[...],
                preferred_element_type=jnp.float32) + b1_ref[...]
    h_ref[...] = h.astype(h_ref.dtype)

    # Per-sublane-group partial sums (tile_b, H1P) -> (8, H1P); the final
    # cross-sublane / cross-core reduction happens in the tiny wrapper fold.
    hg = h.reshape(h.shape[0] // SUBLANE, SUBLANE, h.shape[1])
    s1_ref[...] += jnp.sum(hg, axis=0)
    s2_ref[...] += jnp.sum(hg * hg, axis=0)


# ---------------------------------------------------------------------------
# Pass 2 (tiled path): consume the spilled h, apply folded BN + rest of MLP.
# ---------------------------------------------------------------------------
def _mlp_kernel(h_ref, scale_ref, shift_ref, w2_ref, b2_ref,
                w3_ref, b3_ref, w4_ref, b4_ref, o_ref):
    h = h_ref[...].astype(jnp.float32)
    o_ref[...] = _mlp_tail(
        h, scale_ref[...], shift_ref[...],
        w2_ref[...], b2_ref[...], w3_ref[...], b3_ref[...],
        w4_ref[...], b4_ref[...]).astype(o_ref.dtype)


# ---------------------------------------------------------------------------
# Fused fast path: whole batch in one tile -> single kernel, no h spill.
# Padded (zero) rows contribute exactly b1, removed analytically (no masking).
# ---------------------------------------------------------------------------
def _fused_kernel(x_ref, w1_ref, b1_ref, gamma_ref, beta_ref,
                  w2_ref, b2_ref, w3_ref, b3_ref, w4_ref, b4_ref, o_ref,
                  *, batch):
    h = jnp.dot(x_ref[...], w1_ref[...],
                preferred_element_type=jnp.float32) + b1_ref[...]
    n_pad = x_ref.shape[0] - batch        # static Python int
    b1 = b1_ref[...]
    inv_n = 1.0 / batch

    s1 = jnp.sum(h, axis=0, keepdims=True)
    if n_pad:
        s1 = s1 - float(n_pad) * b1
    mean = s1 * inv_n
    d = h - mean
    s2 = jnp.sum(d * d, axis=0, keepdims=True)
    if n_pad:
        dp = b1 - mean
        s2 = s2 - float(n_pad) * (dp * dp)
    var = jnp.maximum(s2 * inv_n, 0.0)
    scale = gamma_ref[...] * jax.lax.rsqrt(var + BN_EPS)
    shift = beta_ref[...] - mean * scale

    o_ref[...] = _mlp_tail(
        h, scale, shift,
        w2_ref[...], b2_ref[...], w3_ref[...], b3_ref[...],
        w4_ref[...], b4_ref[...]).astype(o_ref.dtype)


# ---------------------------------------------------------------------------
# Wrapper
# ---------------------------------------------------------------------------
def head_forward(x, params, *, tile_b=None, fused_max=None, use_bf16=True,
                 vmem_limit=None):
    """x: (B, 256) f32 -> (B, n_class) f32 softmax probabilities.

    Matches PyTorch training-mode BatchNorm1d (full-batch biased statistics).
    Wrap in jax.jit for production use (the wrapper math then fuses).
    """
    B, F = x.shape
    assert F == F_IN
    d_tile, d_fused, d_vmem = _tpu_defaults()
    tile_b = d_tile if tile_b is None else tile_b
    fused_max = d_fused if fused_max is None else fused_max
    vmem_limit = d_vmem if vmem_limit is None else vmem_limit
    cdtype = jnp.bfloat16 if use_bf16 else jnp.float32

    n_class = params["w4"].shape[1]
    nc_pad = _round_up(n_class, LANE)

    # ---- lane-dense / MXU-friendly parameter prep -------------------------
    # hidden 400 -> 512 so BN/ReLU/stats and matmul-2's K are lane-dense.
    w1p = jnp.zeros((F_IN, H1P), jnp.float32).at[:, :H1].set(params["w1"]).astype(cdtype)
    b1p = jnp.zeros((1, H1P), jnp.float32).at[:, :H1].set(params["b1"])
    gammap = jnp.zeros((1, H1P), jnp.float32).at[:, :H1].set(params["gamma"])
    betap = jnp.zeros((1, H1P), jnp.float32).at[:, :H1].set(params["beta"])
    w2p = jnp.zeros((H1P, H2), jnp.float32).at[:H1, :].set(params["w2"]).astype(cdtype)
    b2 = params["b2"]
    w3 = params["w3"].astype(cdtype)
    b3 = params["b3"]
    # Last layer stays f32; pad classes to 128 lanes, -1e30 bias on padding so
    # the 128-lane softmax equals the n_class softmax on the real columns.
    w4p = jnp.zeros((H3, nc_pad), jnp.float32).at[:, :n_class].set(params["w4"])
    b4p = jnp.full((1, nc_pad), NEG_BIG, jnp.float32).at[:, :n_class].set(params["b4"])

    itemsize = 2 if use_bf16 else 4
    mlp_flops = 2 * (F_IN * H1P + H1P * H2 + H2 * H3 + H3 * nc_pad)
    param_bytes = (itemsize * (F_IN * H1P + H1P * H2 + H2 * H3)
                   + 4 * (H3 * nc_pad + nc_pad + 5 * H1P + H2 + H3))

    # ---------------------- fused single-tile fast path --------------------
    if B <= fused_max:
        b_pad = _round_up(B, SUBLANE)
        xp = x if b_pad == B else jnp.zeros((b_pad, F), x.dtype).at[:B].set(x)
        xp = xp.astype(cdtype)
        out = pl.pallas_call(
            functools.partial(_fused_kernel, batch=B),
            out_shape=jax.ShapeDtypeStruct((b_pad, nc_pad), jnp.float32),
            in_specs=[pl.BlockSpec(memory_space=pltpu.MemorySpace.VMEM)] * 11,
            out_specs=pl.BlockSpec(memory_space=pltpu.MemorySpace.VMEM),
            compiler_params=pltpu.CompilerParams(vmem_limit_bytes=vmem_limit),
            cost_estimate=pl.CostEstimate(
                flops=b_pad * mlp_flops,
                transcendentals=b_pad * nc_pad,
                bytes_accessed=b_pad * (F_IN * itemsize + nc_pad * 4) + param_bytes),
        )(xp, w1p, b1p, gammap, betap, w2p, b2, w3, b3, w4p, b4p)
        return out[:B, :n_class]

    # --------------------------- tiled two-pass path -----------------------
    num_tiles = pl.cdiv(B, tile_b)
    if num_tiles > 1 and num_tiles % 2:
        num_tiles += 1                              # even tile count (v7x megacore)
    tile_b = _round_up(pl.cdiv(B, num_tiles), SUBLANE)
    b_pad = num_tiles * tile_b
    xp = x if b_pad == B else jnp.zeros((b_pad, F), x.dtype).at[:B].set(x)
    xp = xp.astype(cdtype)

    split = 2 if num_tiles % 2 == 0 else 1          # stats sharded across TCs
    tiles_per_split = num_tiles // split
    const2 = lambda c, i: (0, 0)

    # Pass 1: h = x @ w1 + b1 (spilled to HBM in cdtype) + partial BN stats.
    h_sp, s1p, s2p = pl.pallas_call(
        _stats_kernel,
        grid=(split, tiles_per_split),
        out_shape=(jax.ShapeDtypeStruct((b_pad, H1P), cdtype),
                   jax.ShapeDtypeStruct((split * SUBLANE, H1P), jnp.float32),
                   jax.ShapeDtypeStruct((split * SUBLANE, H1P), jnp.float32)),
        in_specs=[pl.BlockSpec((tile_b, F_IN),
                               lambda c, i: (c * tiles_per_split + i, 0)),
                  pl.BlockSpec((F_IN, H1P), const2),
                  pl.BlockSpec((1, H1P), const2)],
        out_specs=(pl.BlockSpec((tile_b, H1P),
                                lambda c, i: (c * tiles_per_split + i, 0)),
                   pl.BlockSpec((SUBLANE, H1P), lambda c, i: (c, 0)),
                   pl.BlockSpec((SUBLANE, H1P), lambda c, i: (c, 0))),
        compiler_params=pltpu.CompilerParams(
            dimension_semantics=("parallel", "arbitrary"),
            vmem_limit_bytes=vmem_limit),
        cost_estimate=pl.CostEstimate(
            flops=2 * b_pad * F_IN * H1P + 3 * b_pad * H1P,
            transcendentals=0,
            bytes_accessed=b_pad * (F_IN + H1P) * itemsize + param_bytes),
    )(xp, w1p, b1p)

    # Fold full-batch (biased, training-mode) BN into one scale/shift.
    s1 = jnp.sum(s1p, axis=0, keepdims=True)
    s2 = jnp.sum(s2p, axis=0, keepdims=True)
    n_pad = b_pad - B
    if n_pad:
        # Padded (zero) input rows contribute exactly b1 per row.
        s1 = s1 - float(n_pad) * b1p
        s2 = s2 - float(n_pad) * (b1p * b1p)
    mean = s1 / B
    var = jnp.maximum(s2 / B - mean * mean, 0.0)
    scale = gammap * jax.lax.rsqrt(var + BN_EPS)
    shift = betap - mean * scale

    # Pass 2: per-tile folded-BN MLP on the spilled h (independent tiles).
    out = pl.pallas_call(
        _mlp_kernel,
        grid=(num_tiles,),
        out_shape=jax.ShapeDtypeStruct((b_pad, nc_pad), jnp.float32),
        in_specs=[pl.BlockSpec((tile_b, H1P), lambda i: (i, 0)),
                  pl.BlockSpec((1, H1P), lambda i: (0, 0)),
                  pl.BlockSpec((1, H1P), lambda i: (0, 0)),
                  pl.BlockSpec((H1P, H2), lambda i: (0, 0)),
                  pl.BlockSpec((1, H2), lambda i: (0, 0)),
                  pl.BlockSpec((H2, H3), lambda i: (0, 0)),
                  pl.BlockSpec((1, H3), lambda i: (0, 0)),
                  pl.BlockSpec((H3, nc_pad), lambda i: (0, 0)),
                  pl.BlockSpec((1, nc_pad), lambda i: (0, 0))],
        out_specs=pl.BlockSpec((tile_b, nc_pad), lambda i: (i, 0)),
        compiler_params=pltpu.CompilerParams(
            dimension_semantics=("parallel",),
            vmem_limit_bytes=vmem_limit),
        cost_estimate=pl.CostEstimate(
            flops=b_pad * 2 * (H1P * H2 + H2 * H3 + H3 * nc_pad),
            transcendentals=b_pad * nc_pad,
            bytes_accessed=b_pad * (H1P * itemsize + nc_pad * 4) + param_bytes),
    )(h_sp, scale, shift, w2p, b2, w3, b3, w4p, b4p)
    return out[:B, :n_class]


# ---------------------------------------------------------------------------
# Parameters + pure-JAX reference
# ---------------------------------------------------------------------------
def init_params(key, n_class):
    """Deterministic synthetic parameters matching the PyTorch module's shapes.

    Linear weights stored transposed as (in, out); biases as (1, out) rows.
    """
    dims = [(256, 400), (400, 128), (128, 32), (32, n_class)]
    keys = jax.random.split(key, 2 * len(dims) + 2)
    params = {}
    for i, (fan_in, fan_out) in enumerate(dims):
        bound = 1.0 / jnp.sqrt(float(fan_in))
        params[f"w{i+1}"] = jax.random.uniform(
            keys[2 * i], (fan_in, fan_out), jnp.float32, -bound, bound)
        params[f"b{i+1}"] = jax.random.uniform(
            keys[2 * i + 1], (1, fan_out), jnp.float32, -bound, bound)
    params["gamma"] = 1.0 + 0.01 * jax.random.normal(keys[-2], (1, 400), jnp.float32)
    params["beta"] = 0.01 * jax.random.normal(keys[-1], (1, 400), jnp.float32)
    return params


def head_reference(x, params):
    """Pure-JAX reference (PyTorch training-mode BatchNorm1d semantics)."""
    h = x @ params["w1"] + params["b1"]
    mean = jnp.mean(h, axis=0, keepdims=True)
    var = jnp.mean((h - mean) ** 2, axis=0, keepdims=True)
    h = (h - mean) / jnp.sqrt(var + BN_EPS) * params["gamma"] + params["beta"]
    h = jnp.maximum(h, 0.0)
    h = jnp.maximum(h @ params["w2"] + params["b2"], 0.0)
    h = jnp.maximum(h @ params["w3"] + params["b3"], 0.0)
    logits = h @ params["w4"] + params["b4"]
    return jax.nn.softmax(logits, axis=-1)


if __name__ == "__main__":
    n_class = 10
    key = jax.random.PRNGKey(0)
    k_x, k_p, k_x2, k_x3 = jax.random.split(key, 4)
    params = init_params(k_p, n_class)

    # 1) Fused fast path, bf16 matmuls (default).
    x_small = jax.random.normal(k_x, (8, 256), jnp.float32)
    ref_small = head_reference(x_small, params)
    out_bf = jax.block_until_ready(head_forward(x_small, params))
    assert out_bf.shape == (8, n_class)
    assert jnp.allclose(jnp.sum(out_bf, axis=-1), 1.0, atol=1e-5)
    assert jnp.allclose(out_bf, ref_small, atol=5e-2, rtol=5e-2)

    # 1b) Same path in full f32, tight tolerance.
    out_f32 = jax.block_until_ready(head_forward(x_small, params, use_bf16=False))
    assert jnp.allclose(out_f32, ref_small, atol=3e-5, rtol=3e-5)

    # 1c) Fused path with batch padding (analytic pad-row stats correction), f32.
    x5 = jax.random.normal(k_x2, (5, 256), jnp.float32)
    out5 = jax.block_until_ready(head_forward(x5, params, use_bf16=False))
    assert jnp.allclose(out5, head_reference(x5, params), atol=3e-5, rtol=3e-5)

    # 2) Tiled two-pass path with the 2-way (megacore) stats split, bf16.
    x_mid = jax.random.normal(k_x2, (64, 256), jnp.float32)
    ref_mid = head_reference(x_mid, params)
    out_mid = jax.block_until_ready(
        head_forward(x_mid, params, tile_b=16, fused_max=8))
    assert out_mid.shape == (64, n_class)
    assert jnp.allclose(jnp.sum(out_mid, axis=-1), 1.0, atol=1e-5)
    assert jnp.allclose(out_mid, ref_mid, atol=5e-2, rtol=5e-2)

    # 3) Tiled path, f32: odd tile count bumped to even + batch padding
    #    (exercises the analytic padded-row correction), tight tolerance.
    x_big = jax.random.normal(k_x3, (20, 256), jnp.float32)
    ref_big = head_reference(x_big, params)
    out_big = jax.block_until_ready(
        head_forward(x_big, params, tile_b=8, fused_max=4, use_bf16=False))
    assert out_big.shape == (20, n_class)
    assert jnp.allclose(jnp.sum(out_big, axis=-1), 1.0, atol=1e-5)
    assert jnp.allclose(out_big, ref_big, atol=3e-5, rtol=3e-5)

    # 4) Single-tile tiled path (split=1 edge case), f32.
    x_tiny = jax.random.normal(k_x, (6, 256), jnp.float32)
    out_tiny = jax.block_until_ready(
        head_forward(x_tiny, params, tile_b=8, fused_max=4, use_bf16=False))
    assert jnp.allclose(out_tiny, head_reference(x_tiny, params),
                        atol=3e-5, rtol=3e-5)

    print("KERNEL_OK")
</pallas_src>

<mosaic_0001>
module attributes {stable_mosaic.version = 11 : i64} {
  func.func @_fused_kernel(%arg0: memref<8x256xbf16, #tpu.memory_space<vmem>>, %arg1: memref<256x512xbf16, #tpu.memory_space<vmem>>, %arg2: memref<1x512xf32, #tpu.memory_space<vmem>>, %arg3: memref<1x512xf32, #tpu.memory_space<vmem>>, %arg4: memref<1x512xf32, #tpu.memory_space<vmem>>, %arg5: memref<512x128xbf16, #tpu.memory_space<vmem>>, %arg6: memref<1x128xf32, #tpu.memory_space<vmem>>, %arg7: memref<128x32xbf16, #tpu.memory_space<vmem>>, %arg8: memref<1x32xf32, #tpu.memory_space<vmem>>, %arg9: memref<32x128xf32, #tpu.memory_space<vmem>>, %arg10: memref<1x128xf32, #tpu.memory_space<vmem>>, %arg11: memref<8x128xf32, #tpu.memory_space<vmem>>) attributes {dimension_semantics = [], scalar_prefetch = 0 : i64, scratch_operands = 0 : i64, tpu.core_type = #tpu.core_type<tc>} {
    %c0 = arith.constant 0 : index
    %c0_0 = arith.constant 0 : index
    %0 = vector.load %arg0[%c0, %c0_0] : memref<8x256xbf16, #tpu.memory_space<vmem>>, vector<8x256xbf16>
    %c0_1 = arith.constant 0 : index
    %c0_2 = arith.constant 0 : index
    %1 = vector.load %arg1[%c0_1, %c0_2] : memref<256x512xbf16, #tpu.memory_space<vmem>>, vector<256x512xbf16>
    %cst = arith.constant dense<0.000000e+00> : vector<8x512xf32>
    %2 = tpu.matmul %0, %1, %cst {dimension_numbers = #tpu.dot_dimension_numbers<[1], [0], [0], [1], [0, 0, 1, 1], [], []>} : vector<8x256xbf16>, vector<256x512xbf16>, vector<8x512xf32> -> vector<8x512xf32>
    %c0_3 = arith.constant 0 : index
    %c0_4 = arith.constant 0 : index
    %3 = vector.load %arg2[%c0_3, %c0_4] : memref<1x512xf32, #tpu.memory_space<vmem>>, vector<1x512xf32>
    %4 = vector.broadcast %3 : vector<1x512xf32> to vector<8x512xf32>
    %5 = arith.addf %2, %4 : vector<8x512xf32>
    %cst_5 = arith.constant dense<0.000000e+00> : vector<512xf32>
    %6 = vector.multi_reduction <add>, %5, %cst_5 [0] : vector<8x512xf32> to vector<512xf32>
    %7 = vector.shape_cast %6 : vector<512xf32> to vector<1x512xf32>
    %cst_6 = arith.constant 1.250000e-01 : f32
    %8 = vector.broadcast %cst_6 : f32 to vector<1x512xf32>
    %9 = arith.mulf %7, %8 : vector<1x512xf32>
    %10 = vector.broadcast %9 : vector<1x512xf32> to vector<8x512xf32>
    %11 = arith.subf %5, %10 : vector<8x512xf32>
    %12 = arith.mulf %11, %11 : vector<8x512xf32>
    %cst_7 = arith.constant dense<0.000000e+00> : vector<512xf32>
    %13 = vector.multi_reduction <add>, %12, %cst_7 [0] : vector<8x512xf32> to vector<512xf32>
    %14 = vector.shape_cast %13 : vector<512xf32> to vector<1x512xf32>
    %cst_8 = arith.constant 1.250000e-01 : f32
    %15 = vector.broadcast %cst_8 : f32 to vector<1x512xf32>
    %16 = arith.mulf %14, %15 : vector<1x512xf32>
    %cst_9 = arith.constant 0.000000e+00 : f32
    %17 = vector.broadcast %cst_9 : f32 to vector<1x512xf32>
    %18 = arith.maximumf %16, %17 : vector<1x512xf32>
    %c0_10 = arith.constant 0 : index
    %c0_11 = arith.constant 0 : index
    %19 = vector.load %arg3[%c0_10, %c0_11] : memref<1x512xf32, #tpu.memory_space<vmem>>, vector<1x512xf32>
    %cst_12 = arith.constant 9.99999974E-6 : f32
    %20 = vector.broadcast %cst_12 : f32 to vector<1x512xf32>
    %21 = arith.addf %18, %20 : vector<1x512xf32>
    %22 = math.rsqrt %21 : vector<1x512xf32>
    %23 = arith.mulf %19, %22 : vector<1x512xf32>
    %c0_13 = arith.constant 0 : index
    %c0_14 = arith.constant 0 : index
    %24 = vector.load %arg4[%c0_13, %c0_14] : memref<1x512xf32, #tpu.memory_space<vmem>>, vector<1x512xf32>
    %25 = arith.mulf %9, %23 : vector<1x512xf32>
    %26 = arith.subf %24, %25 : vector<1x512xf32>
    %c0_15 = arith.constant 0 : index
    %c0_16 = arith.constant 0 : index
    %27 = vector.load %arg5[%c0_15, %c0_16] : memref<512x128xbf16, #tpu.memory_space<vmem>>, vector<512x128xbf16>
    %c0_17 = arith.constant 0 : index
    %c0_18 = arith.constant 0 : index
    %28 = vector.load %arg6[%c0_17, %c0_18] : memref<1x128xf32, #tpu.memory_space<vmem>>, vector<1x128xf32>
    %c0_19 = arith.constant 0 : index
    %c0_20 = arith.constant 0 : index
    %29 = vector.load %arg7[%c0_19, %c0_20] : memref<128x32xbf16, #tpu.memory_space<vmem>>, vector<128x32xbf16>
    %c0_21 = arith.constant 0 : index
    %c0_22 = arith.constant 0 : index
    %30 = vector.load %arg8[%c0_21, %c0_22] : memref<1x32xf32, #tpu.memory_space<vmem>>, vector<1x32xf32>
    %c0_23 = arith.constant 0 : index
    %c0_24 = arith.constant 0 : index
    %31 = vector.load %arg9[%c0_23, %c0_24] : memref<32x128xf32, #tpu.memory_space<vmem>>, vector<32x128xf32>
    %c0_25 = arith.constant 0 : index
    %c0_26 = arith.constant 0 : index
    %32 = vector.load %arg10[%c0_25, %c0_26] : memref<1x128xf32, #tpu.memory_space<vmem>>, vector<1x128xf32>
    %33 = vector.broadcast %23 : vector<1x512xf32> to vector<8x512xf32>
    %34 = arith.mulf %5, %33 : vector<8x512xf32>
    %35 = vector.broadcast %26 : vector<1x512xf32> to vector<8x512xf32>
    %36 = arith.addf %34, %35 : vector<8x512xf32>
    %cst_27 = arith.constant 0.000000e+00 : f32
    %37 = vector.broadcast %cst_27 : f32 to vector<8x512xf32>
    %38 = arith.maximumf %36, %37 : vector<8x512xf32>
    %39 = arith.truncf %38 : vector<8x512xf32> to vector<8x512xbf16>
    %cst_28 = arith.constant dense<0.000000e+00> : vector<8x128xf32>
    %40 = tpu.matmul %39, %27, %cst_28 {dimension_numbers = #tpu.dot_dimension_numbers<[1], [0], [0], [1], [0, 0, 1, 1], [], []>} : vector<8x512xbf16>, vector<512x128xbf16>, vector<8x128xf32> -> vector<8x128xf32>
    %41 = vector.broadcast %28 : vector<1x128xf32> to vector<8x128xf32>
    %42 = arith.addf %40, %41 : vector<8x128xf32>
    %cst_29 = arith.constant 0.000000e+00 : f32
    %43 = vector.broadcast %cst_29 : f32 to vector<8x128xf32>
    %44 = arith.maximumf %42, %43 : vector<8x128xf32>
    %45 = arith.truncf %44 : vector<8x128xf32> to vector<8x128xbf16>
    %cst_30 = arith.constant dense<0.000000e+00> : vector<8x32xf32>
    %46 = tpu.matmul %45, %29, %cst_30 {dimension_numbers = #tpu.dot_dimension_numbers<[1], [0], [0], [1], [0, 0, 1, 1], [], []>} : vector<8x128xbf16>, vector<128x32xbf16>, vector<8x32xf32> -> vector<8x32xf32>
    %47 = vector.broadcast %30 : vector<1x32xf32> to vector<8x32xf32>
    %48 = arith.addf %46, %47 : vector<8x32xf32>
    %cst_31 = arith.constant 0.000000e+00 : f32
    %49 = vector.broadcast %cst_31 : f32 to vector<8x32xf32>
    %50 = arith.maximumf %48, %49 : vector<8x32xf32>
    %cst_32 = arith.constant dense<0.000000e+00> : vector<8x128xf32>
    %51 = tpu.matmul %50, %31, %cst_32 {dimension_numbers = #tpu.dot_dimension_numbers<[1], [0], [0], [1], [0, 0, 1, 1], [], []>} : vector<8x32xf32>, vector<32x128xf32>, vector<8x128xf32> -> vector<8x128xf32>
    %52 = vector.broadcast %32 : vector<1x128xf32> to vector<8x128xf32>
    %53 = arith.addf %51, %52 : vector<8x128xf32>
    %cst_33 = arith.constant dense<0xFF800000> : vector<8xf32>
    %54 = vector.multi_reduction <maximumf>, %53, %cst_33 [1] : vector<8x128xf32> to vector<8xf32>
    %55 = vector.shape_cast %54 : vector<8xf32> to vector<8x1xf32>
    %56 = vector.broadcast %55 : vector<8x1xf32> to vector<8x128xf32>
    %57 = arith.subf %53, %56 : vector<8x128xf32>
    %58 = math.exp %57 : vector<8x128xf32>
    %cst_34 = arith.constant dense<0.000000e+00> : vector<8xf32>
    %59 = vector.multi_reduction <add>, %58, %cst_34 [1] : vector<8x128xf32> to vector<8xf32>
    %60 = vector.shape_cast %59 : vector<8xf32> to vector<8x1xf32>
    %61 = tpu.reciprocal %60 : vector<8x1xf32> -> vector<8x1xf32>
    %62 = vector.broadcast %61 : vector<8x1xf32> to vector<8x128xf32>
    %63 = arith.mulf %58, %62 : vector<8x128xf32>
    %c0_35 = arith.constant 0 : index
    %c0_36 = arith.constant 0 : index
    %64 = vector.load %arg11[%c0_35, %c0_36] : memref<8x128xf32, #tpu.memory_space<vmem>>, vector<8x128xf32>
    tpu.vector_store %arg11[%c0_35, %c0_36], %63 {strides = array<i32>} : memref<8x128xf32, #tpu.memory_space<vmem>>, vector<8x128xf32>,
    return
  }
}

</mosaic_0001>

<llo_original>
// kernel: tpu_custom_call.1
$region0: #{tpu_custom_call.1}
  #allocation0 [shape = 'u32[]', space=smem, size = 0x4, offset = 0x4, fixed_abs, tag = 'smem constant byte address 0x4 - core index']
  #allocation1 [shape = 'u32[144,128]{1,0:T(1,128)}', space=vmem, size = 0x12000, scoped, tag = 'internal scratch']
  %s0 = inlined_call_operand.vmem [shape: bf16[8,256], index: 0, kind: input, shape index: {}]
  %s1 = inlined_call_operand.hbm [shape: bf16[256,512], index: 1, kind: input, shape index: {}]
  %s2 = inlined_call_operand.vmem [shape: f32[1,512], index: 2, kind: input, shape index: {}]
  %s3 = inlined_call_operand.vmem [shape: f32[1,512], index: 3, kind: input, shape index: {}]
  %s4 = inlined_call_operand.vmem [shape: f32[1,512], index: 4, kind: input, shape index: {}]
  %s5 = inlined_call_operand.hbm [shape: bf16[512,128], index: 5, kind: input, shape index: {}]
  %s6 = inlined_call_operand.vmem [shape: f32[1,128], index: 6, kind: input, shape index: {}]
  %s7 = inlined_call_operand.vmem [shape: bf16[128,32], index: 7, kind: input, shape index: {}]
  %s8 = inlined_call_operand.vmem [shape: f32[1,32], index: 8, kind: input, shape index: {}]
  %s9 = inlined_call_operand.vmem [shape: f32[32,128], index: 9, kind: input, shape index: {}]
  %s10 = inlined_call_operand.vmem [shape: f32[1,128], index: 10, kind: input, shape index: {}]
  %s11 = inlined_call_operand.hbm [shape: f32[8,128], index: 11, kind: output, shape index: {}]
  %s12 = sld [smem:[#allocation0]]
  $region62: #{tpu_custom_call.1} parent=0
    _
  %s14 = ssub.s32 1, %s12
  %s15 = scalar_select 0, %s14, %s12
  $region1: #{tpu_custom_call.1} parent=0
    #allocation2 [shape = 'u8[262144]{0}', space=vmem, size = 0x40000, scoped, tag = 'input window, operand 1, single buffered']
    #allocation3 [shape = 's32[1]{0}', space=sflag, size = 0x4, scoped, tag = 'scoped memory for tpu_custom_call.1']
    #allocation4 [shape = 's32[1]{0}', space=sflag, size = 0x4, scoped, tag = 'scoped memory for tpu_custom_call.1']
    #allocation5 [shape = 'u8[131072]{0}', space=vmem, size = 0x20000, scoped, tag = 'input window, operand 5, single buffered']
    #allocation6 [shape = 's32[1]{0}', space=sflag, size = 0x4, scoped, tag = 'scoped memory for tpu_custom_call.1']
    #allocation7 [shape = 'u8[4096]{0}', space=vmem, size = 0x1000, scoped, tag = 'output window, operand 0, single buffered']
    %16 = vsyncpa [#allocation3], 0
    %17 = vsyncpa [#allocation6], 0
    %18 = vsyncpa [#allocation4], 0
    // Predicated region
    $region2: #{tpu_custom_call.1} parent=1 // pred_check
      _
    $region3: #{tpu_custom_call.1} parent=1 // pred_check_branch
      %20 = sbr.rel (0) target = $region5
    $region4: #{tpu_custom_call.1} parent=1 // pred_region
      _
    $region5: #{tpu_custom_call.1} parent=1 // pred_fallthru
      _
    // Predicated region
    $region6: #{tpu_custom_call.1} parent=1 // pred_check
      _
    $region7: #{tpu_custom_call.1} parent=1 // pred_check_branch
      %22 = sbr.rel (0) target = $region9
    $region8: #{tpu_custom_call.1} parent=1 // pred_region
      %s24 = ssub.s32 8192, 8192
      %25 = vsyncadd [#allocation3], %s24
      %s26 = sshll.u32 [#allocation2], 4
      %s27 = int_to_ptr.vmem [resolvable:$true] %s26
      %32 = dma.hbm_to_vmem [thread:$0]  %s1, 8192, %s27, [#allocation3], 256, 256, 16
    $region9: #{tpu_custom_call.1} parent=1 // pred_fallthru
      _
    // Predicated region
    $region10: #{tpu_custom_call.1} parent=1 // pred_check
      _
    $region11: #{tpu_custom_call.1} parent=1 // pred_check_branch
      %34 = sbr.rel (0) target = $region13
    $region12: #{tpu_custom_call.1} parent=1 // pred_region
      _
    $region13: #{tpu_custom_call.1} parent=1 // pred_fallthru
      _
    // Predicated region
    $region14: #{tpu_custom_call.1} parent=1 // pred_check
      _
    $region15: #{tpu_custom_call.1} parent=1 // pred_check_branch
      %36 = sbr.rel (0) target = $region17
    $region16: #{tpu_custom_call.1} parent=1 // pred_region
      _
    $region17: #{tpu_custom_call.1} parent=1 // pred_fallthru
      _
    // Predicated region
    $region18: #{tpu_custom_call.1} parent=1 // pred_check
      _
    $region19: #{tpu_custom_call.1} parent=1 // pred_check_branch
      %38 = sbr.rel (0) target = $region21
    $region20: #{tpu_custom_call.1} parent=1 // pred_region
      _
    $region21: #{tpu_custom_call.1} parent=1 // pred_fallthru
      _
    // Predicated region
    $region22: #{tpu_custom_call.1} parent=1 // pred_check
      _
    $region23: #{tpu_custom_call.1} parent=1 // pred_check_branch
      %40 = sbr.rel (0) target = $region25
    $region24: #{tpu_custom_call.1} parent=1 // pred_region
      %s42 = ssub.s32 4096, 4096
      %43 = vsyncadd [#allocation6], %s42
      %s44 = sshll.u32 [#allocation5], 4
      %s45 = int_to_ptr.vmem [resolvable:$true] %s44
      %50 = dma.hbm_to_vmem [thread:$0]  %s5, 4096, %s45, [#allocation6], 64, 64, 4
    $region25: #{tpu_custom_call.1} parent=1 // pred_fallthru
      _
    // Predicated region
    $region26: #{tpu_custom_call.1} parent=1 // pred_check
      _
    $region27: #{tpu_custom_call.1} parent=1 // pred_check_branch
      %52 = sbr.rel (0) target = $region29
    $region28: #{tpu_custom_call.1} parent=1 // pred_region
      _
    $region29: #{tpu_custom_call.1} parent=1 // pred_fallthru
      _
    // Predicated region
    $region30: #{tpu_custom_call.1} parent=1 // pred_check
      _
    $region31: #{tpu_custom_call.1} parent=1 // pred_check_branch
      %54 = sbr.rel (0) target = $region33
    $region32: #{tpu_custom_call.1} parent=1 // pred_region
      _
    $region33: #{tpu_custom_call.1} parent=1 // pred_fallthru
      _
    // Predicated region
    $region34: #{tpu_custom_call.1} parent=1 // pred_check
      _
    $region35: #{tpu_custom_call.1} parent=1 // pred_check_branch
      %56 = sbr.rel (0) target = $region37
    $region36: #{tpu_custom_call.1} parent=1 // pred_region
      _
    $region37: #{tpu_custom_call.1} parent=1 // pred_fallthru
      _
    // Predicated region
    $region38: #{tpu_custom_call.1} parent=1 // pred_check
      _
    $region39: #{tpu_custom_call.1} parent=1 // pred_check_branch
      %58 = sbr.rel (0) target = $region41
    $region40: #{tpu_custom_call.1} parent=1 // pred_region
      _
    $region41: #{tpu_custom_call.1} parent=1 // pred_fallthru
      _
    // Predicated region
    $region42: #{tpu_custom_call.1} parent=1 // pred_check
      _
    $region43: #{tpu_custom_call.1} parent=1 // pred_check_branch
      %60 = sbr.rel (0) target = $region45
    $region44: #{tpu_custom_call.1} parent=1 // pred_region
      _
    $region45: #{tpu_custom_call.1} parent=1 // pred_fallthru
      _
    // Predicated region
    $region46: #{tpu_custom_call.1} parent=1 // pred_check
      _
    $region47: #{tpu_custom_call.1} parent=1 // pred_check_branch
      %62 = sbr.rel (0) target = $region49
    $region48: #{tpu_custom_call.1} parent=1 // pred_region
      %63 = dma.done [#allocation3], 8192
    $region49: #{tpu_custom_call.1} parent=1 // pred_fallthru
      _
    // Predicated region
    $region50: #{tpu_custom_call.1} parent=1 // pred_check
      _
    $region51: #{tpu_custom_call.1} parent=1 // pred_check_branch
      %65 = sbr.rel (0) target = $region53
    $region52: #{tpu_custom_call.1} parent=1 // pred_region
      %66 = dma.done [#allocation6], 4096
    $region53: #{tpu_custom_call.1} parent=1 // pred_fallthru
      _
    %v68 = vld [vmem:[%s0] sm:$0xff]
    %v69 = vld [vmem:[#allocation2] sm:$0xff]
    %v70 = vld [vmem:[#allocation2 + $0x8] sm:$0xff]
    %v71 = vld [vmem:[#allocation2 + $0x10] sm:$0xff]
    %v72 = vld [vmem:[#allocation2 + $0x18] sm:$0xff]
    %v73 = vld [vmem:[#allocation2 + $0x20] sm:$0xff]
    %v74 = vld [vmem:[#allocation2 + $0x28] sm:$0xff]
    %v75 = vld [vmem:[#allocation2 + $0x30] sm:$0xff]
    %v76 = vld [vmem:[#allocation2 + $0x38] sm:$0xff]
    %v77 = vld [vmem:[#allocation2 + $0x40] sm:$0xff]
    %v78 = vld [vmem:[#allocation2 + $0x48] sm:$0xff]
    %v79 = vld [vmem:[#allocation2 + $0x50] sm:$0xff]
    %v80 = vld [vmem:[#allocation2 + $0x58] sm:$0xff]
    %v81 = vld [vmem:[#allocation2 + $0x60] sm:$0xff]
    %v82 = vld [vmem:[#allocation2 + $0x68] sm:$0xff]
    %v83 = vld [vmem:[#allocation2 + $0x70] sm:$0xff]
    %v84 = vld [vmem:[#allocation2 + $0x78] sm:$0xff]
    %v85 = vld [vmem:[#allocation2 + $0x80] sm:$0xff]
    %v86 = vld [vmem:[#allocation2 + $0x88] sm:$0xff]
    %v87 = vld [vmem:[#allocation2 + $0x90] sm:$0xff]
    %v88 = vld [vmem:[#allocation2 + $0x98] sm:$0xff]
    %v89 = vld [vmem:[#allocation2 + $0xa0] sm:$0xff]
    %v90 = vld [vmem:[#allocation2 + $0xa8] sm:$0xff]
    %v91 = vld [vmem:[#allocation2 + $0xb0] sm:$0xff]
    %v92 = vld [vmem:[#allocation2 + $0xb8] sm:$0xff]
    %v93 = vld [vmem:[#allocation2 + $0xc0] sm:$0xff]
    %v94 = vld [vmem:[#allocation2 + $0xc8] sm:$0xff]
    %v95 = vld [vmem:[#allocation2 + $0xd0] sm:$0xff]
    %v96 = vld [vmem:[#allocation2 + $0xd8] sm:$0xff]
    %v97 = vld [vmem:[#allocation2 + $0xe0] sm:$0xff]
    %v98 = vld [vmem:[#allocation2 + $0xe8] sm:$0xff]
    %v99 = vld [vmem:[#allocation2 + $0xf0] sm:$0xff]
    %v100 = vld [vmem:[#allocation2 + $0xf8] sm:$0xff]
    %v101 = vld [vmem:[#allocation2 + $0x100] sm:$0xff]
    %v102 = vld [vmem:[#allocation2 + $0x108] sm:$0xff]
    %v103 = vld [vmem:[#allocation2 + $0x110] sm:$0xff]
    %v104 = vld [vmem:[#allocation2 + $0x118] sm:$0xff]
    %v105 = vld [vmem:[#allocation2 + $0x120] sm:$0xff]
    %v106 = vld [vmem:[#allocation2 + $0x128] sm:$0xff]
    %v107 = vld [vmem:[#allocation2 + $0x130] sm:$0xff]
    %v108 = vld [vmem:[#allocation2 + $0x138] sm:$0xff]
    %v109 = vld [vmem:[#allocation2 + $0x140] sm:$0xff]
    %v110 = vld [vmem:[#allocation2 + $0x148] sm:$0xff]
    %v111 = vld [vmem:[#allocation2 + $0x150] sm:$0xff]
    %v112 = vld [vmem:[#allocation2 + $0x158] sm:$0xff]
    %v113 = vld [vmem:[#allocation2 + $0x160] sm:$0xff]
    %v114 = vld [vmem:[#allocation2 + $0x168] sm:$0xff]
    %v115 = vld [vmem:[#allocation2 + $0x170] sm:$0xff]
    %v116 = vld [vmem:[#allocation2 + $0x178] sm:$0xff]
    %v117 = vld [vmem:[#allocation2 + $0x180] sm:$0xff]
    %v118 = vld [vmem:[#allocation2 + $0x188] sm:$0xff]
    %v119 = vld [vmem:[#allocation2 + $0x190] sm:$0xff]
    %v120 = vld [vmem:[#allocation2 + $0x198] sm:$0xff]
    %v121 = vld [vmem:[#allocation2 + $0x1a0] sm:$0xff]
    %v122 = vld [vmem:[#allocation2 + $0x1a8] sm:$0xff]
    %v123 = vld [vmem:[#allocation2 + $0x1b0] sm:$0xff]
    %v124 = vld [vmem:[#allocation2 + $0x1b8] sm:$0xff]
    %v125 = vld [vmem:[#allocation2 + $0x1c0] sm:$0xff]
    %v126 = vld [vmem:[#allocation2 + $0x1c8] sm:$0xff]
    %v127 = vld [vmem:[#allocation2 + $0x1d0] sm:$0xff]
    %v128 = vld [vmem:[#allocation2 + $0x1d8] sm:$0xff]
    %v129 = vld [vmem:[#allocation2 + $0x1e0] sm:$0xff]
    %v130 = vld [vmem:[#allocation2 + $0x1e8] sm:$0xff]
    %v131 = vld [vmem:[#allocation2 + $0x1f0] sm:$0xff]
    %v132 = vld [vmem:[#allocation2 + $0x1f8] sm:$0xff]
    %v133 = vld [vmem:[%s2] sm:$0xf]
    %v135 = vlaneseq
    %v136 = vshrl.u32 %v135, 7
    %v137 = vsub.s32 0, %v136
    %v138 = vrot.slane %v133, %v137
    %v139 = vlaneseq
    %v140 = vshrl.u32 %v139, 7
    %v141 = vsub.s32 1, %v140
    %v142 = vrot.slane %v133, %v141
    %v143 = vlaneseq
    %v144 = vshrl.u32 %v143, 7
    %v145 = vsub.s32 2, %v144
    %v146 = vrot.slane %v133, %v145
    %v147 = vlaneseq
    %v148 = vshrl.u32 %v147, 7
    %v149 = vsub.s32 3, %v148
    %v150 = vrot.slane %v133, %v149
    %v156 = vunpack.c.l.b16 %v68
    %v157 = vunpack.c.h.b16 %v68
    %v158 = vpack.c.b16 %v156, %v156
    %v159 = vpack.c.b16 %v157, %v157
    %v226 = vunpack.c.l.b16 %v69
    %v227 = vunpack.c.h.b16 %v69
    %v228 = vunpack.c.l.b16 %v70
    %v229 = vunpack.c.h.b16 %v70
    %v230 = vunpack.c.l.b16 %v71
    %v231 = vunpack.c.h.b16 %v71
    %v232 = vunpack.c.l.b16 %v72
    %v233 = vunpack.c.h.b16 %v72
    %v234 = vunpack.c.l.b16 %v73
    %v235 = vunpack.c.h.b16 %v73
    %v236 = vunpack.c.l.b16 %v74
    %v237 = vunpack.c.h.b16 %v74
    %v238 = vunpack.c.l.b16 %v75
    %v239 = vunpack.c.h.b16 %v75
    %v240 = vunpack.c.l.b16 %v76
    %v241 = vunpack.c.h.b16 %v76
    %v242 = vunpack.c.l.b16 %v77
    %v243 = vunpack.c.h.b16 %v77
    %v244 = vunpack.c.l.b16 %v78
    %v245 = vunpack.c.h.b16 %v78
    %v246 = vunpack.c.l.b16 %v79
    %v247 = vunpack.c.h.b16 %v79
    %v248 = vunpack.c.l.b16 %v80
    %v249 = vunpack.c.h.b16 %v80
    %v250 = vunpack.c.l.b16 %v81
    %v251 = vunpack.c.h.b16 %v81
    %v252 = vunpack.c.l.b16 %v82
    %v253 = vunpack.c.h.b16 %v82
    %v254 = vunpack.c.l.b16 %v83
    %v255 = vunpack.c.h.b16 %v83
    %v256 = vunpack.c.l.b16 %v84
    %v257 = vunpack.c.h.b16 %v84
    %v258 = vunpack.c.l.b16 %v85
    %v259 = vunpack.c.h.b16 %v85
    %v260 = vunpack.c.l.b16 %v86
    %v261 = vunpack.c.h.b16 %v86
    %v262 = vunpack.c.l.b16 %v87
    %v263 = vunpack.c.h.b16 %v87
    %v264 = vunpack.c.l.b16 %v88
    %v265 = vunpack.c.h.b16 %v88
    %v266 = vunpack.c.l.b16 %v89
    %v267 = vunpack.c.h.b16 %v89
    %v268 = vunpack.c.l.b16 %v90
    %v269 = vunpack.c.h.b16 %v90
    %v270 = vunpack.c.l.b16 %v91
    %v271 = vunpack.c.h.b16 %v91
    %v272 = vunpack.c.l.b16 %v92
    %v273 = vunpack.c.h.b16 %v92
    %v274 = vunpack.c.l.b16 %v93
    %v275 = vunpack.c.h.b16 %v93
    %v276 = vunpack.c.l.b16 %v94
    %v277 = vunpack.c.h.b16 %v94
    %v278 = vunpack.c.l.b16 %v95
    %v279 = vunpack.c.h.b16 %v95
    %v280 = vunpack.c.l.b16 %v96
    %v281 = vunpack.c.h.b16 %v96
    %v282 = vunpack.c.l.b16 %v97
    %v283 = vunpack.c.h.b16 %v97
    %v284 = vunpack.c.l.b16 %v98
    %v285 = vunpack.c.h.b16 %v98
    %v286 = vunpack.c.l.b16 %v99
    %v287 = vunpack.c.h.b16 %v99
    %v288 = vunpack.c.l.b16 %v100
    %v289 = vunpack.c.h.b16 %v100
    %v290 = vunpack.c.l.b16 %v101
    %v291 = vunpack.c.h.b16 %v101
    %v292 = vunpack.c.l.b16 %v102
    %v293 = vunpack.c.h.b16 %v102
    %v294 = vunpack.c.l.b16 %v103
    %v295 = vunpack.c.h.b16 %v103
    %v296 = vunpack.c.l.b16 %v104
    %v297 = vunpack.c.h.b16 %v104
    %v298 = vunpack.c.l.b16 %v105
    %v299 = vunpack.c.h.b16 %v105
    %v300 = vunpack.c.l.b16 %v106
    %v301 = vunpack.c.h.b16 %v106
    %v302 = vunpack.c.l.b16 %v107
    %v303 = vunpack.c.h.b16 %v107
    %v304 = vunpack.c.l.b16 %v108
    %v305 = vunpack.c.h.b16 %v108
    %v306 = vunpack.c.l.b16 %v109
    %v307 = vunpack.c.h.b16 %v109
    %v308 = vunpack.c.l.b16 %v110
    %v309 = vunpack.c.h.b16 %v110
    %v310 = vunpack.c.l.b16 %v111
    %v311 = vunpack.c.h.b16 %v111
    %v312 = vunpack.c.l.b16 %v112
    %v313 = vunpack.c.h.b16 %v112
    %v314 = vunpack.c.l.b16 %v113
    %v315 = vunpack.c.h.b16 %v113
    %v316 = vunpack.c.l.b16 %v114
    %v317 = vunpack.c.h.b16 %v114
    %v318 = vunpack.c.l.b16 %v115
    %v319 = vunpack.c.h.b16 %v115
    %v320 = vunpack.c.l.b16 %v116
    %v321 = vunpack.c.h.b16 %v116
    %v322 = vunpack.c.l.b16 %v117
    %v323 = vunpack.c.h.b16 %v117
    %v324 = vunpack.c.l.b16 %v118
    %v325 = vunpack.c.h.b16 %v118
    %v326 = vunpack.c.l.b16 %v119
    %v327 = vunpack.c.h.b16 %v119
    %v328 = vunpack.c.l.b16 %v120
    %v329 = vunpack.c.h.b16 %v120
    %v330 = vunpack.c.l.b16 %v121
    %v331 = vunpack.c.h.b16 %v121
    %v332 = vunpack.c.l.b16 %v122
    %v333 = vunpack.c.h.b16 %v122
    %v334 = vunpack.c.l.b16 %v123
    %v335 = vunpack.c.h.b16 %v123
    %v336 = vunpack.c.l.b16 %v124
    %v337 = vunpack.c.h.b16 %v124
    %v338 = vunpack.c.l.b16 %v125
    %v339 = vunpack.c.h.b16 %v125
    %v340 = vunpack.c.l.b16 %v126
    %v341 = vunpack.c.h.b16 %v126
    %v342 = vunpack.c.l.b16 %v127
    %v343 = vunpack.c.h.b16 %v127
    %v344 = vunpack.c.l.b16 %v128
    %v345 = vunpack.c.h.b16 %v128
    %v346 = vunpack.c.l.b16 %v129
    %v347 = vunpack.c.h.b16 %v129
    %v348 = vunpack.c.l.b16 %v130
    %v349 = vunpack.c.h.b16 %v130
    %v350 = vunpack.c.l.b16 %v131
    %v351 = vunpack.c.h.b16 %v131
    %v352 = vunpack.c.l.b16 %v132
    %v353 = vunpack.c.h.b16 %v132
    %v354 = vpack.c.b16 %v230, %v226
    %v355 = vpack.c.b16 %v231, %v227
    %v356 = vpack.c.b16 %v232, %v228
    %v357 = vpack.c.b16 %v233, %v229
    %v358 = vpack.c.b16 %v238, %v234
    %v359 = vpack.c.b16 %v239, %v235
    %v360 = vpack.c.b16 %v240, %v236
    %v361 = vpack.c.b16 %v241, %v237
    %v362 = vpack.c.b16 %v246, %v242
    %v363 = vpack.c.b16 %v247, %v243
    %v364 = vpack.c.b16 %v248, %v244
    %v365 = vpack.c.b16 %v249, %v245
    %v366 = vpack.c.b16 %v254, %v250
    %v367 = vpack.c.b16 %v255, %v251
    %v368 = vpack.c.b16 %v256, %v252
    %v369 = vpack.c.b16 %v257, %v253
    %v370 = vpack.c.b16 %v262, %v258
    %v371 = vpack.c.b16 %v263, %v259
    %v372 = vpack.c.b16 %v264, %v260
    %v373 = vpack.c.b16 %v265, %v261
    %v374 = vpack.c.b16 %v270, %v266
    %v375 = vpack.c.b16 %v271, %v267
    %v376 = vpack.c.b16 %v272, %v268
    %v377 = vpack.c.b16 %v273, %v269
    %v378 = vpack.c.b16 %v278, %v274
    %v379 = vpack.c.b16 %v279, %v275
    %v380 = vpack.c.b16 %v280, %v276
    %v381 = vpack.c.b16 %v281, %v277
    %v382 = vpack.c.b16 %v286, %v282
    %v383 = vpack.c.b16 %v287, %v283
    %v384 = vpack.c.b16 %v288, %v284
    %v385 = vpack.c.b16 %v289, %v285
    %v386 = vpack.c.b16 %v294, %v290
    %v387 = vpack.c.b16 %v295, %v291
    %v388 = vpack.c.b16 %v296, %v292
    %v389 = vpack.c.b16 %v297, %v293
    %v390 = vpack.c.b16 %v302, %v298
    %v391 = vpack.c.b16 %v303, %v299
    %v392 = vpack.c.b16 %v304, %v300
    %v393 = vpack.c.b16 %v305, %v301
    %v394 = vpack.c.b16 %v310, %v306
    %v395 = vpack.c.b16 %v311, %v307
    %v396 = vpack.c.b16 %v312, %v308
    %v397 = vpack.c.b16 %v313, %v309
    %v398 = vpack.c.b16 %v318, %v314
    %v399 = vpack.c.b16 %v319, %v315
    %v400 = vpack.c.b16 %v320, %v316
    %v401 = vpack.c.b16 %v321, %v317
    %v402 = vpack.c.b16 %v326, %v322
    %v403 = vpack.c.b16 %v327, %v323
    %v404 = vpack.c.b16 %v328, %v324
    %v405 = vpack.c.b16 %v329, %v325
    %v406 = vpack.c.b16 %v334, %v330
    %v407 = vpack.c.b16 %v335, %v331
    %v408 = vpack.c.b16 %v336, %v332
    %v409 = vpack.c.b16 %v337, %v333
    %v410 = vpack.c.b16 %v342, %v338
    %v411 = vpack.c.b16 %v343, %v339
    %v412 = vpack.c.b16 %v344, %v340
    %v413 = vpack.c.b16 %v345, %v341
    %v414 = vpack.c.b16 %v350, %v346
    %v415 = vpack.c.b16 %v351, %v347
    %v416 = vpack.c.b16 %v352, %v348
    %v417 = vpack.c.b16 %v353, %v349
    %482 = vmatprep.subr.bf16.mxu0 %v355
    %483 = vmatpush1.bf16.msra.mxu0 %v354
    %484 = vmatprep.subr.bf16.mxu0 %v359
    %485 = vmatpush1.bf16.msra.mxu0 %v358
    %486 = vmatprep.subr.bf16.mxu0 %v363
    %487 = vmatpush1.bf16.msra.mxu0 %v362
    %488 = vmatprep.subr.bf16.mxu0 %v367
    %489 = vmatpush1.bf16.msra.mxu0 %v366
    %490 = vmatprep.subr.bf16.mxu0 %v371
    %491 = vmatpush1.bf16.msra.mxu0 %v370
    %492 = vmatprep.subr.bf16.mxu0 %v375
    %493 = vmatpush1.bf16.msra.mxu0 %v374
    %494 = vmatprep.subr.bf16.mxu0 %v379
    %495 = vmatpush1.bf16.msra.mxu0 %v378
    %496 = vmatprep.subr.bf16.mxu0 %v383
    %497 = vmatpush1.bf16.msra.mxu0 %v382
    %498 = vmatprep.subr.bf16.mxu0 %v387
    %499 = vmatpush1.bf16.msra.mxu0 %v386
    %500 = vmatprep.subr.bf16.mxu0 %v391
    %501 = vmatpush1.bf16.msra.mxu0 %v390
    %502 = vmatprep.subr.bf16.mxu0 %v395
    %503 = vmatpush1.bf16.msra.mxu0 %v394
    %504 = vmatprep.subr.bf16.mxu0 %v399
    %505 = vmatpush1.bf16.msra.mxu0 %v398
    %506 = vmatprep.subr.bf16.mxu0 %v403
    %507 = vmatpush1.bf16.msra.mxu0 %v402
    %508 = vmatprep.subr.bf16.mxu0 %v407
    %509 = vmatpush1.bf16.msra.mxu0 %v406
    %510 = vmatprep.subr.bf16.mxu0 %v411
    %511 = vmatpush1.bf16.msra.mxu0 %v410
    %512 = vmatprep.subr.bf16.mxu0 %v415
    %513 = vmatpush1.bf16.msra.mxu0 %v414
    %514 = vmatprep.mubr.bf16.mxu0 %v159
    %515 = vmatmul.mubr.bf16.gmra.mrb[0].mxu0 %v158
    %v516 = vpop.f32.mrb[0].mxu0
    %v517 = vadd.f32 %v138, %v516
    %v518 = vpop.f32.mrb[0].mxu0
    %v519 = vadd.f32 %v142, %v518
    %v520 = vpop.f32.mrb[0].mxu0
    %v521 = vpop.f32.mrb[0].mxu0
    %522 = vdwg.mxu0
    %523 = vmatprep.subr.bf16.mxu0 %v357
    %524 = vmatpush1.bf16.msra.mxu0 %v356
    %525 = vmatprep.subr.bf16.mxu0 %v361
    %526 = vmatpush1.bf16.msra.mxu0 %v360
    %527 = vmatprep.subr.bf16.mxu0 %v365
    %528 = vmatpush1.bf16.msra.mxu0 %v364
    %529 = vmatprep.subr.bf16.mxu0 %v369
    %530 = vmatpush1.bf16.msra.mxu0 %v368
    %531 = vmatprep.subr.bf16.mxu0 %v373
    %532 = vmatpush1.bf16.msra.mxu0 %v372
    %533 = vmatprep.subr.bf16.mxu0 %v377
    %534 = vmatpush1.bf16.msra.mxu0 %v376
    %535 = vmatprep.subr.bf16.mxu0 %v381
    %536 = vmatpush1.bf16.msra.mxu0 %v380
    %537 = vmatprep.subr.bf16.mxu0 %v385
    %538 = vmatpush1.bf16.msra.mxu0 %v384
    %539 = vmatprep.subr.bf16.mxu0 %v389
    %540 = vmatpush1.bf16.msra.mxu0 %v388
    %541 = vmatprep.subr.bf16.mxu0 %v393
    %542 = vmatpush1.bf16.msra.mxu0 %v392
    %543 = vmatprep.subr.bf16.mxu0 %v397
    %544 = vmatpush1.bf16.msra.mxu0 %v396
    %545 = vmatprep.subr.bf16.mxu0 %v401
    %546 = vmatpush1.bf16.msra.mxu0 %v400
    %547 = vmatprep.subr.bf16.mxu0 %v405
    %548 = vmatpush1.bf16.msra.mxu0 %v404
    %549 = vmatprep.subr.bf16.mxu0 %v409
    %550 = vmatpush1.bf16.msra.mxu0 %v408
    %551 = vmatprep.subr.bf16.mxu0 %v413
    %552 = vmatpush1.bf16.msra.mxu0 %v412
    %553 = vmatprep.subr.bf16.mxu0 %v417
    %554 = vmatpush1.bf16.msra.mxu0 %v416
    %555 = vmatprep.mubr.bf16.mxu0 %v159
    %556 = vmatmul.mubr.bf16.gmra.mrb[0].mxu0 %v158
    %v557 = vpop.f32.mrb[0].mxu0
    %v558 = vadd.f32 %v146, %v557
    %v559 = vpop.f32.mrb[0].mxu0
    %v560 = vadd.f32 %v150, %v559
    %v561 = vpop.f32.mrb[0].mxu0
    %v562 = vpop.f32.mrb[0].mxu0
    %563 = vdwg.mxu0
    %v564 = vrot.slane %v517, 4
    %v565 = vadd.f32 %v517, %v564
    %v566 = vrot.slane %v565, 2
    %v567 = vadd.f32 %v565, %v566
    %v568 = vrot.slane %v567, 1
    %v569 = vadd.f32 %v567, %v568
    %v570 = vrot.slane %v519, 4
    %v571 = vadd.f32 %v519, %v570
    %v572 = vrot.slane %v571, 2
    %v573 = vadd.f32 %v571, %v572
    %v574 = vrot.slane %v573, 1
    %v575 = vadd.f32 %v573, %v574
    %v576 = vrot.slane %v558, 4
    %v577 = vadd.f32 %v558, %v576
    %v578 = vrot.slane %v577, 2
    %v579 = vadd.f32 %v577, %v578
    %v580 = vrot.slane %v579, 1
    %v581 = vadd.f32 %v579, %v580
    %v582 = vrot.slane %v560, 4
    %v583 = vadd.f32 %v560, %v582
    %v584 = vrot.slane %v583, 2
    %v585 = vadd.f32 %v583, %v584
    %v586 = vrot.slane %v585, 1
    %v587 = vadd.f32 %v585, %v586
    %v588 = vmul.f32 %v569, 0.125
    %v589 = vmul.f32 %v575, 0.125
    %v590 = vmul.f32 %v581, 0.125
    %v591 = vmul.f32 %v587, 0.125
    %v592 = vsub.f32 %v517, %v588
    %v593 = vsub.f32 %v519, %v589
    %v594 = vsub.f32 %v558, %v590
    %v595 = vsub.f32 %v560, %v591
    %v596 = vmul.f32 %v592, %v592
    %v597 = vmul.f32 %v593, %v593
    %v598 = vmul.f32 %v594, %v594
    %v599 = vmul.f32 %v595, %v595
    %v600 = vrot.slane %v596, 4
    %v601 = vadd.f32 %v596, %v600
    %v602 = vrot.slane %v601, 2
    %v603 = vadd.f32 %v601, %v602
    %v604 = vrot.slane %v603, 1
    %v605 = vadd.f32 %v603, %v604
    %v606 = vrot.slane %v597, 4
    %v607 = vadd.f32 %v597, %v606
    %v608 = vrot.slane %v607, 2
    %v609 = vadd.f32 %v607, %v608
    %v610 = vrot.slane %v609, 1
    %v611 = vadd.f32 %v609, %v610
    %v612 = vrot.slane %v598, 4
    %v613 = vadd.f32 %v598, %v612
    %v614 = vrot.slane %v613, 2
    %v615 = vadd.f32 %v613, %v614
    %v616 = vrot.slane %v615, 1
    %v617 = vadd.f32 %v615, %v616
    %v618 = vrot.slane %v599, 4
    %v619 = vadd.f32 %v599, %v618
    %v620 = vrot.slane %v619, 2
    %v621 = vadd.f32 %v619, %v620
    %v622 = vrot.slane %v621, 1
    %v623 = vadd.f32 %v621, %v622
    %v624 = vmul.f32 %v605, 0.125
    %v625 = vmul.f32 %v611, 0.125
    %v626 = vmul.f32 %v617, 0.125
    %v627 = vmul.f32 %v623, 0.125
    %v628 = vmax.f32 %v624, 0.0
    %v629 = vmax.f32 %v625, 0.0
    %v630 = vmax.f32 %v626, 0.0
    %v631 = vmax.f32 %v627, 0.0
    %v632 = vld [vmem:[%s3] sm:$0xf]
    %v633 = vadd.f32 %v628, 1e-05
    %v634 = vadd.f32 %v629, 1e-05
    %v635 = vadd.f32 %v630, 1e-05
    %v636 = vadd.f32 %v631, 1e-05
    %v637 = vrsqrt.pop %v633
    %v638 = vrsqrt.pop %v634
    %v639 = vrsqrt.pop %v635
    %v640 = vrsqrt.pop %v636
    %v645 = vcombine.low %v637, %v638
    %v646 = vcombine.low %v639, %v640
    %v648 = vunpack.c.l.s4 1966171168
    %v649 = vunpack.c.0.s8 %v648
    %v650 = vlaneseq
    %v651 = vshrl.u32 %v650, 7
    %v652 = vsub.s32 %v649, %v651
    %v653 = vrot.slane %v645, %v652
    %v655 = vunpack.c.l.s4 1966171168
    %v656 = vunpack.c.0.s8 %v655
    %v657 = vlaneseq
    %v658 = vshrl.u32 %v657, 7
    %v659 = vsub.s32 %v656, %v658
    %v660 = vrot.slane %v646, %v659
    %v661 = vcombine.low %v653, %v660
    %v663 = vunpack.c.l.s4 1966171168
    %v664 = vunpack.c.0.s8 %v663
    %v665 = vlaneseq
    %v666 = vshrl.u32 %v665, 7
    %v667 = vsub.s32 %v664, %v666
    %v668 = vrot.slane %v661, %v667
    %v670 = vmul.f32 %v632, %v668
    %v671 = vld [vmem:[%s4] sm:$0xf]
    %v673 = vlaneseq
    %v674 = vshrl.u32 %v673, 7
    %v675 = vsub.s32 0, %v674
    %v676 = vrot.slane %v670, %v675
    %v677 = vlaneseq
    %v678 = vshrl.u32 %v677, 7
    %v679 = vsub.s32 1, %v678
    %v680 = vrot.slane %v670, %v679
    %v681 = vlaneseq
    %v682 = vshrl.u32 %v681, 7
    %v683 = vsub.s32 2, %v682
    %v684 = vrot.slane %v670, %v683
    %v685 = vlaneseq
    %v686 = vshrl.u32 %v685, 7
    %v687 = vsub.s32 3, %v686
    %v688 = vrot.slane %v670, %v687
    %v693 = vmul.f32 %v588, %v676
    %v694 = vmul.f32 %v589, %v680
    %v695 = vmul.f32 %v590, %v684
    %v696 = vmul.f32 %v591, %v688
    %v701 = vcombine.low %v693, %v694
    %v702 = vcombine.low %v695, %v696
    %v704 = vunpack.c.l.s4 1966171168
    %v705 = vunpack.c.0.s8 %v704
    %v706 = vlaneseq
    %v707 = vshrl.u32 %v706, 7
    %v708 = vsub.s32 %v705, %v707
    %v709 = vrot.slane %v701, %v708
    %v711 = vunpack.c.l.s4 1966171168
    %v712 = vunpack.c.0.s8 %v711
    %v713 = vlaneseq
    %v714 = vshrl.u32 %v713, 7
    %v715 = vsub.s32 %v712, %v714
    %v716 = vrot.slane %v702, %v715
    %v717 = vcombine.low %v709, %v716
    %v719 = vunpack.c.l.s4 1966171168
    %v720 = vunpack.c.0.s8 %v719
    %v721 = vlaneseq
    %v722 = vshrl.u32 %v721, 7
    %v723 = vsub.s32 %v720, %v722
    %v724 = vrot.slane %v717, %v723
    %v726 = vsub.f32 %v671, %v724
    %v727 = vld [vmem:[#allocation5] sm:$0xf]
    %v728 = vld [vmem:[#allocation5 + $0x4] sm:$0xf]
    %v729 = vld [vmem:[#allocation5 + $0x8] sm:$0xf]
    %v730 = vld [vmem:[#allocation5 + $0xc] sm:$0xf]
    %v731 = vld [vmem:[#allocation5 + $0x10] sm:$0xf]
    %v732 = vld [vmem:[#allocation5 + $0x14] sm:$0xf]
    %v733 = vld [vmem:[#allocation5 + $0x18] sm:$0xf]
    %v734 = vld [vmem:[#allocation5 + $0x1c] sm:$0xf]
    %v735 = vld [vmem:[#allocation5 + $0x20] sm:$0xf]
    %v736 = vld [vmem:[#allocation5 + $0x24] sm:$0xf]
    %v737 = vld [vmem:[#allocation5 + $0x28] sm:$0xf]
    %v738 = vld [vmem:[#allocation5 + $0x2c] sm:$0xf]
    %v739 = vld [vmem:[#allocation5 + $0x30] sm:$0xf]
    %v740 = vld [vmem:[#allocation5 + $0x34] sm:$0xf]
    %v741 = vld [vmem:[#allocation5 + $0x38] sm:$0xf]
    %v742 = vld [vmem:[#allocation5 + $0x3c] sm:$0xf]
    %v743 = vld [vmem:[#allocation5 + $0x40] sm:$0xf]
    %v744 = vld [vmem:[#allocation5 + $0x44] sm:$0xf]
    %v745 = vld [vmem:[#allocation5 + $0x48] sm:$0xf]
    %v746 = vld [vmem:[#allocation5 + $0x4c] sm:$0xf]
    %v747 = vld [vmem:[#allocation5 + $0x50] sm:$0xf]
    %v748 = vld [vmem:[#allocation5 + $0x54] sm:$0xf]
    %v749 = vld [vmem:[#allocation5 + $0x58] sm:$0xf]
    %v750 = vld [vmem:[#allocation5 + $0x5c] sm:$0xf]
    %v751 = vld [vmem:[#allocation5 + $0x60] sm:$0xf]
    %v752 = vld [vmem:[#allocation5 + $0x64] sm:$0xf]
    %v753 = vld [vmem:[#allocation5 + $0x68] sm:$0xf]
    %v754 = vld [vmem:[#allocation5 + $0x6c] sm:$0xf]
    %v755 = vld [vmem:[#allocation5 + $0x70] sm:$0xf]
    %v756 = vld [vmem:[#allocation5 + $0x74] sm:$0xf]
    %v757 = vld [vmem:[#allocation5 + $0x78] sm:$0xf]
    %v758 = vld [vmem:[#allocation5 + $0x7c] sm:$0xf]
    %v759 = vld [vmem:[#allocation5 + $0x80] sm:$0xf]
    %v760 = vld [vmem:[#allocation5 + $0x84] sm:$0xf]
    %v761 = vld [vmem:[#allocation5 + $0x88] sm:$0xf]
    %v762 = vld [vmem:[#allocation5 + $0x8c] sm:$0xf]
    %v763 = vld [vmem:[#allocation5 + $0x90] sm:$0xf]
    %v764 = vld [vmem:[#allocation5 + $0x94] sm:$0xf]
    %v765 = vld [vmem:[#allocation5 + $0x98] sm:$0xf]
    %v766 = vld [vmem:[#allocation5 + $0x9c] sm:$0xf]
    %v767 = vld [vmem:[#allocation5 + $0xa0] sm:$0xf]
    %v768 = vld [vmem:[#allocation5 + $0xa4] sm:$0xf]
    %v769 = vld [vmem:[#allocation5 + $0xa8] sm:$0xf]
    %v770 = vld [vmem:[#allocation5 + $0xac] sm:$0xf]
    %v771 = vld [vmem:[#allocation5 + $0xb0] sm:$0xf]
    %v772 = vld [vmem:[#allocation5 + $0xb4] sm:$0xf]
    %v773 = vld [vmem:[#allocation5 + $0xb8] sm:$0xf]
    %v774 = vld [vmem:[#allocation5 + $0xbc] sm:$0xf]
    %v775 = vld [vmem:[#allocation5 + $0xc0] sm:$0xf]
    %v776 = vld [vmem:[#allocation5 + $0xc4] sm:$0xf]
    %v777 = vld [vmem:[#allocation5 + $0xc8] sm:$0xf]
    %v778 = vld [vmem:[#allocation5 + $0xcc] sm:$0xf]
    %v779 = vld [vmem:[#allocation5 + $0xd0] sm:$0xf]
    %v780 = vld [vmem:[#allocation5 + $0xd4] sm:$0xf]
    %v781 = vld [vmem:[#allocation5 + $0xd8] sm:$0xf]
    %v782 = vld [vmem:[#allocation5 + $0xdc] sm:$0xf]
    %v783 = vld [vmem:[#allocation5 + $0xe0] sm:$0xf]
    %v784 = vld [vmem:[#allocation5 + $0xe4] sm:$0xf]
    %v785 = vld [vmem:[#allocation5 + $0xe8] sm:$0xf]
    %v786 = vld [vmem:[#allocation5 + $0xec] sm:$0xf]
    %v787 = vld [vmem:[#allocation5 + $0xf0] sm:$0xf]
    %v788 = vld [vmem:[#allocation5 + $0xf4] sm:$0xf]
    %v789 = vld [vmem:[#allocation5 + $0xf8] sm:$0xf]
    %v790 = vld [vmem:[#allocation5 + $0xfc] sm:$0xf]
    %v791 = vld [vmem:[%s6] sm:$0x1]
    %v792 = vld [vmem:[%s7] sm:$0xf]
    %v793 = vld [vmem:[%s7 + $0x4] sm:$0xf]
    %v794 = vld [vmem:[%s7 + $0x8] sm:$0xf]
    %v795 = vld [vmem:[%s7 + $0xc] sm:$0xf]
    %v796 = vld [vmem:[%s7 + $0x10] sm:$0xf]
    %v797 = vld [vmem:[%s7 + $0x14] sm:$0xf]
    %v798 = vld [vmem:[%s7 + $0x18] sm:$0xf]
    %v799 = vld [vmem:[%s7 + $0x1c] sm:$0xf]
    %v800 = vld [vmem:[%s7 + $0x20] sm:$0xf]
    %v801 = vld [vmem:[%s7 + $0x24] sm:$0xf]
    %v802 = vld [vmem:[%s7 + $0x28] sm:$0xf]
    %v803 = vld [vmem:[%s7 + $0x2c] sm:$0xf]
    %v804 = vld [vmem:[%s7 + $0x30] sm:$0xf]
    %v805 = vld [vmem:[%s7 + $0x34] sm:$0xf]
    %v806 = vld [vmem:[%s7 + $0x38] sm:$0xf]
    %v807 = vld [vmem:[%s7 + $0x3c] sm:$0xf]
    %v808 = vld [vmem:[%s8] sm:$0x1]
    %v809 = vld [vmem:[%s9] sm:$0xff]
    %v810 = vld [vmem:[%s9 + $0x8] sm:$0xff]
    %v811 = vld [vmem:[%s9 + $0x10] sm:$0xff]
    %v812 = vld [vmem:[%s9 + $0x18] sm:$0xff]
    %v813 = vld [vmem:[%s10] sm:$0x1]
    %v814 = vmul.f32 %v517, %v676
    %v815 = vmul.f32 %v519, %v680
    %v816 = vmul.f32 %v558, %v684
    %v817 = vmul.f32 %v560, %v688
    %v819 = vlaneseq
    %v820 = vshrl.u32 %v819, 7
    %v821 = vsub.s32 0, %v820
    %v822 = vrot.slane %v726, %v821
    %v823 = vlaneseq
    %v824 = vshrl.u32 %v823, 7
    %v825 = vsub.s32 1, %v824
    %v826 = vrot.slane %v726, %v825
    %v827 = vlaneseq
    %v828 = vshrl.u32 %v827, 7
    %v829 = vsub.s32 2, %v828
    %v830 = vrot.slane %v726, %v829
    %v831 = vlaneseq
    %v832 = vshrl.u32 %v831, 7
    %v833 = vsub.s32 3, %v832
    %v834 = vrot.slane %v726, %v833
    %v839 = vadd.f32 %v814, %v822
    %v840 = vadd.f32 %v815, %v826
    %v841 = vadd.f32 %v816, %v830
    %v842 = vadd.f32 %v817, %v834
    %v843 = vmax.f32 %v839, 0.0
    %v844 = vmax.f32 %v840, 0.0
    %v845 = vmax.f32 %v841, 0.0
    %v846 = vmax.f32 %v842, 0.0
    %v847 = vpack.c.bf16 %v843, %v843
    %v848 = vpack.c.bf16 %v844, %v844
    %v849 = vpack.c.bf16 %v845, %v845
    %v850 = vpack.c.bf16 %v846, %v846
    %v852 = vlaneseq
    %v853 = vshrl.u32 %v852, 7
    %v854 = vsub.s32 0, %v853
    %v855 = vrot.slane %v791, %v854
    %v921 = vunpack.c.l.b16 %v727
    %v922 = vunpack.c.l.b16 %v728
    %v923 = vunpack.c.l.b16 %v729
    %v924 = vunpack.c.l.b16 %v730
    %v925 = vunpack.c.l.b16 %v731
    %v926 = vunpack.c.l.b16 %v732
    %v927 = vunpack.c.l.b16 %v733
    %v928 = vunpack.c.l.b16 %v734
    %v929 = vunpack.c.l.b16 %v735
    %v930 = vunpack.c.l.b16 %v736
    %v931 = vunpack.c.l.b16 %v737
    %v932 = vunpack.c.l.b16 %v738
    %v933 = vunpack.c.l.b16 %v739
    %v934 = vunpack.c.l.b16 %v740
    %v935 = vunpack.c.l.b16 %v741
    %v936 = vunpack.c.l.b16 %v742
    %v937 = vunpack.c.l.b16 %v743
    %v938 = vunpack.c.l.b16 %v744
    %v939 = vunpack.c.l.b16 %v745
    %v940 = vunpack.c.l.b16 %v746
    %v941 = vunpack.c.l.b16 %v747
    %v942 = vunpack.c.l.b16 %v748
    %v943 = vunpack.c.l.b16 %v749
    %v944 = vunpack.c.l.b16 %v750
    %v945 = vunpack.c.l.b16 %v751
    %v946 = vunpack.c.l.b16 %v752
    %v947 = vunpack.c.l.b16 %v753
    %v948 = vunpack.c.l.b16 %v754
    %v949 = vunpack.c.l.b16 %v755
    %v950 = vunpack.c.l.b16 %v756
    %v951 = vunpack.c.l.b16 %v757
    %v952 = vunpack.c.l.b16 %v758
    %v953 = vunpack.c.l.b16 %v759
    %v954 = vunpack.c.l.b16 %v760
    %v955 = vunpack.c.l.b16 %v761
    %v956 = vunpack.c.l.b16 %v762
    %v957 = vunpack.c.l.b16 %v763
    %v958 = vunpack.c.l.b16 %v764
    %v959 = vunpack.c.l.b16 %v765
    %v960 = vunpack.c.l.b16 %v766
    %v961 = vunpack.c.l.b16 %v767
    %v962 = vunpack.c.l.b16 %v768
    %v963 = vunpack.c.l.b16 %v769
    %v964 = vunpack.c.l.b16 %v770
    %v965 = vunpack.c.l.b16 %v771
    %v966 = vunpack.c.l.b16 %v772
    %v967 = vunpack.c.l.b16 %v773
    %v968 = vunpack.c.l.b16 %v774
    %v969 = vunpack.c.l.b16 %v775
    %v970 = vunpack.c.l.b16 %v776
    %v971 = vunpack.c.l.b16 %v777
    %v972 = vunpack.c.l.b16 %v778
    %v973 = vunpack.c.l.b16 %v779
    %v974 = vunpack.c.l.b16 %v780
    %v975 = vunpack.c.l.b16 %v781
    %v976 = vunpack.c.l.b16 %v782
    %v977 = vunpack.c.l.b16 %v783
    %v978 = vunpack.c.l.b16 %v784
    %v979 = vunpack.c.l.b16 %v785
    %v980 = vunpack.c.l.b16 %v786
    %v981 = vunpack.c.l.b16 %v787
    %v982 = vunpack.c.l.b16 %v788
    %v983 = vunpack.c.l.b16 %v789
    %v984 = vunpack.c.l.b16 %v790
    %v985 = vpack.c.b16 %v922, %v921
    %v986 = vpack.c.b16 %v924, %v923
    %v987 = vpack.c.b16 %v926, %v925
    %v988 = vpack.c.b16 %v928, %v927
    %v989 = vpack.c.b16 %v930, %v929
    %v990 = vpack.c.b16 %v932, %v931
    %v991 = vpack.c.b16 %v934, %v933
    %v992 = vpack.c.b16 %v936, %v935
    %v993 = vpack.c.b16 %v938, %v937
    %v994 = vpack.c.b16 %v940, %v939
    %v995 = vpack.c.b16 %v942, %v941
    %v996 = vpack.c.b16 %v944, %v943
    %v997 = vpack.c.b16 %v946, %v945
    %v998 = vpack.c.b16 %v948, %v947
    %v999 = vpack.c.b16 %v950, %v949
    %v1000 = vpack.c.b16 %v952, %v951
    %v1001 = vpack.c.b16 %v954, %v953
    %v1002 = vpack.c.b16 %v956, %v955
    %v1003 = vpack.c.b16 %v958, %v957
    %v1004 = vpack.c.b16 %v960, %v959
    %v1005 = vpack.c.b16 %v962, %v961
    %v1006 = vpack.c.b16 %v964, %v963
    %v1007 = vpack.c.b16 %v966, %v965
    %v1008 = vpack.c.b16 %v968, %v967
    %v1009 = vpack.c.b16 %v970, %v969
    %v1010 = vpack.c.b16 %v972, %v971
    %v1011 = vpack.c.b16 %v974, %v973
    %v1012 = vpack.c.b16 %v976, %v975
    %v1013 = vpack.c.b16 %v978, %v977
    %v1014 = vpack.c.b16 %v980, %v979
    %v1015 = vpack.c.b16 %v982, %v981
    %v1016 = vpack.c.b16 %v984, %v983
    %1049 = vmatprep.subr.bf16.mxu0 0
    %1050 = vmatpush1.bf16.msra.mxu0 %v985
    %1051 = vmatprep.subr.bf16.mxu0 0
    %1052 = vmatpush1.bf16.msra.mxu0 %v986
    %1053 = vmatprep.subr.bf16.mxu0 0
    %1054 = vmatpush1.bf16.msra.mxu0 %v987
    %1055 = vmatprep.subr.bf16.mxu0 0
    %1056 = vmatpush1.bf16.msra.mxu0 %v988
    %1057 = vmatprep.subr.bf16.mxu0 0
    %1058 = vmatpush1.bf16.msra.mxu0 %v989
    %1059 = vmatprep.subr.bf16.mxu0 0
    %1060 = vmatpush1.bf16.msra.mxu0 %v990
    %1061 = vmatprep.subr.bf16.mxu0 0
    %1062 = vmatpush1.bf16.msra.mxu0 %v991
    %1063 = vmatprep.subr.bf16.mxu0 0
    %1064 = vmatpush1.bf16.msra.mxu0 %v992
    %1065 = vmatprep.subr.bf16.mxu0 0
    %1066 = vmatpush1.bf16.msra.mxu0 %v993
    %1067 = vmatprep.subr.bf16.mxu0 0
    %1068 = vmatpush1.bf16.msra.mxu0 %v994
    %1069 = vmatprep.subr.bf16.mxu0 0
    %1070 = vmatpush1.bf16.msra.mxu0 %v995
    %1071 = vmatprep.subr.bf16.mxu0 0
    %1072 = vmatpush1.bf16.msra.mxu0 %v996
    %1073 = vmatprep.subr.bf16.mxu0 0
    %1074 = vmatpush1.bf16.msra.mxu0 %v997
    %1075 = vmatprep.subr.bf16.mxu0 0
    %1076 = vmatpush1.bf16.msra.mxu0 %v998
    %1077 = vmatprep.subr.bf16.mxu0 0
    %1078 = vmatpush1.bf16.msra.mxu0 %v999
    %1079 = vmatprep.subr.bf16.mxu0 0
    %1080 = vmatpush1.bf16.msra.mxu0 %v1000
    %1081 = vmatprep.mubr.bf16.mxu0 %v848
    %1082 = vmatmul.mubr.bf16.gmra.mrb[0].mxu0 %v847
    %v1083 = vpop.f32.mrb[0].mxu0
    %v1084 = vadd.f32 %v855, %v1083
    %v1085 = vpop.f32.mrb[0].mxu0
    %v1086 = vpop.f32.mrb[0].mxu0
    %v1087 = vpop.f32.mrb[0].mxu0
    %1088 = vdwg.mxu0
    %1089 = vmatprep.subr.bf16.mxu0 0
    %1090 = vmatpush1.bf16.msra.mxu0 %v1001
    %1091 = vmatprep.subr.bf16.mxu0 0
    %1092 = vmatpush1.bf16.msra.mxu0 %v1002
    %1093 = vmatprep.subr.bf16.mxu0 0
    %1094 = vmatpush1.bf16.msra.mxu0 %v1003
    %1095 = vmatprep.subr.bf16.mxu0 0
    %1096 = vmatpush1.bf16.msra.mxu0 %v1004
    %1097 = vmatprep.subr.bf16.mxu0 0
    %1098 = vmatpush1.bf16.msra.mxu0 %v1005
    %1099 = vmatprep.subr.bf16.mxu0 0
    %1100 = vmatpush1.bf16.msra.mxu0 %v1006
    %1101 = vmatprep.subr.bf16.mxu0 0
    %1102 = vmatpush1.bf16.msra.mxu0 %v1007
    %1103 = vmatprep.subr.bf16.mxu0 0
    %1104 = vmatpush1.bf16.msra.mxu0 %v1008
    %1105 = vmatprep.subr.bf16.mxu0 0
    %1106 = vmatpush1.bf16.msra.mxu0 %v1009
    %1107 = vmatprep.subr.bf16.mxu0 0
    %1108 = vmatpush1.bf16.msra.mxu0 %v1010
    %1109 = vmatprep.subr.bf16.mxu0 0
    %1110 = vmatpush1.bf16.msra.mxu0 %v1011
    %1111 = vmatprep.subr.bf16.mxu0 0
    %1112 = vmatpush1.bf16.msra.mxu0 %v1012
    %1113 = vmatprep.subr.bf16.mxu0 0
    %1114 = vmatpush1.bf16.msra.mxu0 %v1013
    %1115 = vmatprep.subr.bf16.mxu0 0
    %1116 = vmatpush1.bf16.msra.mxu0 %v1014
    %1117 = vmatprep.subr.bf16.mxu0 0
    %1118 = vmatpush1.bf16.msra.mxu0 %v1015
    %1119 = vmatprep.subr.bf16.mxu0 0
    %1120 = vmatpush1.bf16.msra.mxu0 %v1016
    %1121 = vmatprep.mubr.bf16.mxu0 %v850
    %1122 = vmatmul.mubr.bf16.gmra.mrb[0].mxu0 %v849
    %v1123 = vpop.f32.mrb[0].mxu0
    %v1124 = vadd.f32 %v1084, %v1123
    %v1125 = vpop.f32.mrb[0].mxu0
    %v1126 = vpop.f32.mrb[0].mxu0
    %v1127 = vpop.f32.mrb[0].mxu0
    %1128 = vdwg.mxu0
    %v1129 = vmax.f32 %v1124, 0.0
    %v1130 = vpack.c.bf16 %v1129, %v1129
    %v1132 = vlaneseq
    %v1133 = vshrl.u32 %v1132, 7
    %v1134 = vsub.s32 0, %v1133
    %v1135 = vrot.slane %v808, %v1134
    %v1153 = vunpack.c.l.b16 %v792
    %v1154 = vunpack.c.l.b16 %v793
    %v1155 = vunpack.c.l.b16 %v794
    %v1156 = vunpack.c.l.b16 %v795
    %v1157 = vunpack.c.l.b16 %v796
    %v1158 = vunpack.c.l.b16 %v797
    %v1159 = vunpack.c.l.b16 %v798
    %v1160 = vunpack.c.l.b16 %v799
    %v1161 = vunpack.c.l.b16 %v800
    %v1162 = vunpack.c.l.b16 %v801
    %v1163 = vunpack.c.l.b16 %v802
    %v1164 = vunpack.c.l.b16 %v803
    %v1165 = vunpack.c.l.b16 %v804
    %v1166 = vunpack.c.l.b16 %v805
    %v1167 = vunpack.c.l.b16 %v806
    %v1168 = vunpack.c.l.b16 %v807
    %v1169 = vpack.c.b16 %v1154, %v1153
    %v1170 = vpack.c.b16 %v1156, %v1155
    %v1171 = vpack.c.b16 %v1158, %v1157
    %v1172 = vpack.c.b16 %v1160, %v1159
    %v1173 = vpack.c.b16 %v1162, %v1161
    %v1174 = vpack.c.b16 %v1164, %v1163
    %v1175 = vpack.c.b16 %v1166, %v1165
    %v1176 = vpack.c.b16 %v1168, %v1167
    %1185 = vmatprep.subr.bf16.mxu0 0
    %1186 = vmatpush1.bf16.msra.mxu0 %v1169
    %1187 = vmatprep.subr.bf16.mxu0 0
    %1188 = vmatpush1.bf16.msra.mxu0 %v1170
    %1189 = vmatprep.subr.bf16.mxu0 0
    %1190 = vmatpush1.bf16.msra.mxu0 %v1171
    %1191 = vmatprep.subr.bf16.mxu0 0
    %1192 = vmatpush1.bf16.msra.mxu0 %v1172
    %1193 = vmatprep.subr.bf16.mxu0 0
    %1194 = vmatpush1.bf16.msra.mxu0 %v1173
    %1195 = vmatprep.subr.bf16.mxu0 0
    %1196 = vmatpush1.bf16.msra.mxu0 %v1174
    %1197 = vmatprep.subr.bf16.mxu0 0
    %1198 = vmatpush1.bf16.msra.mxu0 %v1175
    %1199 = vmatprep.subr.bf16.mxu0 0
    %1200 = vmatpush1.bf16.msra.mxu0 %v1176
    %1201 = vmatprep.subr.bf16.mxu0 0
    %1202 = vmatpush1.bf16.msra.mxu0 0
    %1203 = vmatprep.subr.bf16.mxu0 0
    %1204 = vmatpush1.bf16.msra.mxu0 0
    %1205 = vmatprep.subr.bf16.mxu0 0
    %1206 = vmatpush1.bf16.msra.mxu0 0
    %1207 = vmatprep.subr.bf16.mxu0 0
    %1208 = vmatpush1.bf16.msra.mxu0 0
    %1209 = vmatprep.subr.bf16.mxu0 0
    %1210 = vmatpush1.bf16.msra.mxu0 0
    %1211 = vmatprep.subr.bf16.mxu0 0
    %1212 = vmatpush1.bf16.msra.mxu0 0
    %1213 = vmatprep.subr.bf16.mxu0 0
    %1214 = vmatpush1.bf16.msra.mxu0 0
    %1215 = vmatprep.subr.bf16.mxu0 0
    %1216 = vmatpush1.bf16.msra.mxu0 0
    %1217 = vmatprep.mubr.bf16.mxu0 0
    %1218 = vmatmul.mubr.bf16.gmra.mrb[0].mxu0 %v1130
    %v1219 = vpop.f32.mrb[0].mxu0
    %v1220 = vadd.f32 %v1135, %v1219
    %v1221 = vpop.f32.mrb[0].mxu0
    %v1222 = vpop.f32.mrb[0].mxu0
    %v1223 = vpop.f32.mrb[0].mxu0
    %1224 = vdwg.mxu0
    %v1225 = vmax.f32 %v1220, 0.0
    %v1227 = vlaneseq
    %v1228 = vshrl.u32 %v1227, 7
    %v1229 = vsub.s32 0, %v1228
    %v1230 = vrot.slane %v813, %v1229
    %vm1232 = vcmask 261120
    %v1234 = vsel %vm1232, %v1225, 0
    %1236 = vmatprep.subr.mxu0 0.0
    %1237 = vmatpush1.msra.mxu0 %v809
    %1238 = vmatprep.subr.mxu0 0.0
    %1239 = vmatpush1.msra.mxu0 %v810
    %1240 = vmatprep.subr.mxu0 0.0
    %1241 = vmatpush1.msra.mxu0 %v811
    %1242 = vmatprep.subr.mxu0 0.0
    %1243 = vmatpush1.msra.mxu0 %v812
    %1244 = vmatprep.subr.mxu0 0.0
    %1245 = vmatpush1.msra.mxu0 0.0
    %1246 = vmatprep.subr.mxu0 0.0
    %1247 = vmatpush1.msra.mxu0 0.0
    %1248 = vmatprep.subr.mxu0 0.0
    %1249 = vmatpush1.msra.mxu0 0.0
    %1250 = vmatprep.subr.mxu0 0.0
    %1251 = vmatpush1.msra.mxu0 0.0
    %1252 = vmatprep.subr.mxu0 0.0
    %1253 = vmatpush1.msra.mxu0 0.0
    %1254 = vmatprep.subr.mxu0 0.0
    %1255 = vmatpush1.msra.mxu0 0.0
    %1256 = vmatprep.subr.mxu0 0.0
    %1257 = vmatpush1.msra.mxu0 0.0
    %1258 = vmatprep.subr.mxu0 0.0
    %1259 = vmatpush1.msra.mxu0 0.0
    %1260 = vmatprep.subr.mxu0 0.0
    %1261 = vmatpush1.msra.mxu0 0.0
    %1262 = vmatprep.subr.mxu0 0.0
    %1263 = vmatpush1.msra.mxu0 0.0
    %1264 = vmatprep.subr.mxu0 0.0
    %1265 = vmatpush1.msra.mxu0 0.0
    %1266 = vmatprep.subr.mxu0 0.0
    %1267 = vmatpush1.msra.mxu0 0.0
    %1268 = vmatprep.subr.mxu0 0.0
    %1269 = vmatpush1.msra.mxu0 0.0
    %1270 = vmatprep.subr.mxu0 0.0
    %1271 = vmatpush1.msra.mxu0 0.0
    %1272 = vmatprep.subr.mxu0 0.0
    %1273 = vmatpush1.msra.mxu0 0.0
    %1274 = vmatprep.subr.mxu0 0.0
    %1275 = vmatpush1.msra.mxu0 0.0
    %1276 = vmatprep.subr.mxu0 0.0
    %1277 = vmatpush1.msra.mxu0 0.0
    %1278 = vmatprep.subr.mxu0 0.0
    %1279 = vmatpush1.msra.mxu0 0.0
    %1280 = vmatprep.subr.mxu0 0.0
    %1281 = vmatpush1.msra.mxu0 0.0
    %1282 = vmatprep.subr.mxu0 0.0
    %1283 = vmatpush1.msra.mxu0 0.0
    %1284 = vmatprep.subr.mxu0 0.0
    %1285 = vmatpush1.msra.mxu0 0.0
    %1286 = vmatprep.subr.mxu0 0.0
    %1287 = vmatpush1.msra.mxu0 0.0
    %1288 = vmatprep.subr.mxu0 0.0
    %1289 = vmatpush1.msra.mxu0 0.0
    %1290 = vmatprep.subr.mxu0 0.0
    %1291 = vmatpush1.msra.mxu0 0.0
    %1292 = vmatprep.subr.mxu0 0.0
    %1293 = vmatpush1.msra.mxu0 0.0
    %1294 = vmatprep.subr.mxu0 0.0
    %1295 = vmatpush1.msra.mxu0 0.0
    %1296 = vmatprep.subr.mxu0 0.0
    %1297 = vmatpush1.msra.mxu0 0.0
    %1298 = vmatprep.subr.mxu0 0.0
    %1299 = vmatpush1.msra.mxu0 0.0
    %1300 = vmatprep.mubr.f32.mxu0 0.0
    %1301 = vmatmul.mubr.f32.gmra.mrb[0].mxu0 %v1234
    %v1302 = vpop.f32.mrb[0].mxu0
    %v1303 = vadd.f32 %v1230, %v1302
    %v1304 = vpop.f32.mrb[0].mxu0
    %1305 = vdwg.mxu0
    %1306 = vmax.xlane.f32.xlu0 %v1303
    %v1307 = vpop.xlane.xlu0 %1306
    %v1308 = vsub.f32 %v1303, %v1307
    %v1309 = vmul.f32 %v1308, 1.442695
    %v1310 = vpow.pop %v1309
    %1311 = vadd.xlane.f32.xlu0 %v1310
    %v1312 = vpop.xlane.xlu0 %1311
    %v1313 = vrcp.pop %v1312
    %v1314 = vmul.f32 %v1310, %v1313
    %1315 = vst [vmem:[#allocation7] sm:$0xff] %v1314
    // Predicated region
    $region54: #{tpu_custom_call.1} parent=1 // pred_check
      _
    $region55: #{tpu_custom_call.1} parent=1 // pred_check_branch
      %1317 = sbr.rel (0) target = $region57
    $region56: #{tpu_custom_call.1} parent=1 // pred_region
      %s1319 = ssub.s32 128, 128
      %1320 = vsyncadd [#allocation4], %s1319
      %s1322 = sshll.u32 [#allocation7], 4
      %s1323 = int_to_ptr.vmem [resolvable:$true] %s1322
      %1325 = dma.vmem_to_hbm [thread:$0]  %s1323, 128, %s11, [#allocation4]
    $region57: #{tpu_custom_call.1} parent=1 // pred_fallthru
      _
    // Predicated region
    $region58: #{tpu_custom_call.1} parent=1 // pred_check
      _
    $region59: #{tpu_custom_call.1} parent=1 // pred_check_branch
      %1327 = sbr.rel (0) target = $region61
    $region60: #{tpu_custom_call.1} parent=1 // pred_region
      %1328 = dma.done [#allocation4], 128
    $region61: #{tpu_custom_call.1} parent=1 // pred_fallthru
      _
    %1329 = vsyncpa [#allocation3], 1
    %1330 = vsyncpa [#allocation6], 1
    %1331 = vsyncpa [#allocation4], 1

</llo_original>
